<compile_context>
chip_gen: v6e
topology: v6e:2x2x1
jax: 0.10.0
libtpu: 0.0.40
codegen_flags: <defaults>
</compile_context>

<pallas_src>
import jax
import jax.numpy as jnp
from jax.experimental import pallas as pl
from jax.experimental.pallas import tpu as pltpu


def _round_up(x, m):
    return ((x + m - 1) // m) * m


def ffn_kernel(x_ref, w1_ref, b1_ref, w2_ref, b2_ref, o_ref, acc_ref):
    # grid = (row_tiles, hid_chunks); axis 1 is the d_hid reduction axis.
    # x_ref : (tm, d_in)        w1_ref: (d_in, tk)      b1_ref: (1, tk)
    # w2_ref: (tk, d_out_pad)   b2_ref: (1, d_out_pad)
    # o_ref : (tm, d_out_pad)   acc_ref: (tm, d_out_pad) f32 scratch
    k = pl.program_id(1)

    @pl.when(k == 0)
    def _():
        acc_ref[...] = jnp.zeros_like(acc_ref)

    # First layer chunk on the MXU: native-dtype operands, f32 accumulation.
    h = jnp.dot(x_ref[...], w1_ref[...], preferred_element_type=jnp.float32)
    h = jnp.maximum(h + b1_ref[...].astype(jnp.float32), 0.0)  # bias + ReLU (VPU)

    # Second layer chunk, accumulated over the d_hid reduction axis.
    acc_ref[...] += jnp.dot(h.astype(w2_ref.dtype), w2_ref[...],
                            preferred_element_type=jnp.float32)

    @pl.when(k == pl.num_programs(1) - 1)
    def _():
        o_ref[...] = (acc_ref[...] + b2_ref[...].astype(jnp.float32)).astype(o_ref.dtype)


def position_wise_ffn(x, w1, b1, w2, b2, *, tm=256, tk=512):
    """relu(x @ w1 + b1) @ w2 + b2, position-wise.

    x: (B, S, d_in); w1: (d_in, d_hid); b1: (d_hid,);
    w2: (d_hid, d_out); b2: (d_out,).  Returns (B, S, d_out).
    Weights are stored (in, out), i.e. transposed vs. torch nn.Linear."""
    B, S, d_in = x.shape
    d_hid = w1.shape[1]
    d_out = w2.shape[1]
    M = B * S

    # --- row tiling: tm multiple of 8, padded M divisible by the tile ---
    tm = max(8, _round_up(tm, 8))
    tm_eff = _round_up(M, 8) if _round_up(M, 8) <= tm else tm
    M_pad = _round_up(M, tm_eff)

    # --- hidden (reduction) tiling: multiples of 128, divides padded d_hid ---
    d_hid_pad = _round_up(d_hid, 128)
    tk = max(128, _round_up(tk, 128))
    if d_hid_pad <= tk:
        tk_eff = d_hid_pad
    else:
        tk_eff = tk
        while d_hid_pad % tk_eff:
            tk_eff -= 128

    # --- lane-dense output: pad d_out to a multiple of 128 ---
    d_out_pad = _round_up(d_out, 128)

    # Zero-pad operands (pure layout work in the wrapper; sliced off after).
    x2 = x.reshape(M, d_in)
    if M_pad != M:
        x2 = jnp.pad(x2, ((0, M_pad - M), (0, 0)))
    w1p = jnp.pad(w1, ((0, 0), (0, d_hid_pad - d_hid)))
    b1p = jnp.pad(b1, (0, d_hid_pad - d_hid)).reshape(1, d_hid_pad)
    w2p = jnp.pad(w2, ((0, d_hid_pad - d_hid), (0, d_out_pad - d_out)))
    b2p = jnp.pad(b2, (0, d_out_pad - d_out)).reshape(1, d_out_pad)

    grid = (M_pad // tm_eff, d_hid_pad // tk_eff)

    itemsize = jnp.dtype(x.dtype).itemsize
    cost = pl.CostEstimate(
        flops=2 * M * d_in * d_hid + 2 * M * d_hid * d_out,
        transcendentals=0,
        bytes_accessed=itemsize * (M * d_in + d_in * d_hid + d_hid
                                   + d_hid * d_out + d_out + M * d_out),
    )

    out = pl.pallas_call(
        ffn_kernel,
        out_shape=jax.ShapeDtypeStruct((M_pad, d_out_pad), x.dtype),
        grid_spec=pltpu.PrefetchScalarGridSpec(
            num_scalar_prefetch=0,
            grid=grid,
            in_specs=[
                pl.BlockSpec((tm_eff, d_in), lambda i, k: (i, 0)),        # x rows
                pl.BlockSpec((d_in, tk_eff), lambda i, k: (0, k)),        # W1 chunk
                pl.BlockSpec((1, tk_eff), lambda i, k: (0, k)),           # b1 chunk
                pl.BlockSpec((tk_eff, d_out_pad), lambda i, k: (k, 0)),   # W2 chunk
                pl.BlockSpec((1, d_out_pad), lambda i, k: (0, 0)),        # b2
            ],
            out_specs=pl.BlockSpec((tm_eff, d_out_pad), lambda i, k: (i, 0)),
            scratch_shapes=[pltpu.VMEM((tm_eff, d_out_pad), jnp.float32)],
        ),
        compiler_params=pltpu.CompilerParams(
            dimension_semantics=("parallel", "arbitrary")),
        cost_estimate=cost,
    )(x2, w1p, b1p, w2p, b2p)

    return out[:M, :d_out].reshape(B, S, d_out)


if __name__ == "__main__":
    # Shapes implied by the module's forward: X = (batch, seq, features)
    B, S = 2, 8
    ffn_num_input, ffn_num_hiddens, ffn_num_outputs = 32, 64, 32

    key = jax.random.PRNGKey(0)
    kx, kw1, kb1, kw2, kb2 = jax.random.split(key, 5)

    x = jax.random.normal(kx, (B, S, ffn_num_input), dtype=jnp.float32)
    lim1 = 1.0 / (ffn_num_input ** 0.5)
    lim2 = 1.0 / (ffn_num_hiddens ** 0.5)
    w1 = jax.random.uniform(kw1, (ffn_num_input, ffn_num_hiddens),
                            minval=-lim1, maxval=lim1, dtype=jnp.float32)
    b1 = jax.random.uniform(kb1, (ffn_num_hiddens,),
                            minval=-lim1, maxval=lim1, dtype=jnp.float32)
    w2 = jax.random.uniform(kw2, (ffn_num_hiddens, ffn_num_outputs),
                            minval=-lim2, maxval=lim2, dtype=jnp.float32)
    b2 = jax.random.uniform(kb2, (ffn_num_outputs,),
                            minval=-lim2, maxval=lim2, dtype=jnp.float32)

    y = position_wise_ffn(x, w1, b1, w2, b2)
    y = jax.block_until_ready(y)

    # Pure-JAX reference check
    ref = jnp.maximum(x @ w1 + b1, 0.0) @ w2 + b2
    assert y.shape == (B, S, ffn_num_outputs)
    assert jnp.allclose(y, ref, atol=1e-4, rtol=1e-4), "mismatch vs reference"

    print("KERNEL_OK")
</pallas_src>

<mosaic_0001>
module attributes {stable_mosaic.version = 11 : i64} {
  func.func @ffn_kernel(%arg0: i32, %arg1: i32, %arg2: memref<16x32xf32, #tpu.memory_space<vmem>>, %arg3: memref<32x128xf32, #tpu.memory_space<vmem>>, %arg4: memref<1x128xf32, #tpu.memory_space<vmem>>, %arg5: memref<128x128xf32, #tpu.memory_space<vmem>>, %arg6: memref<1x128xf32, #tpu.memory_space<vmem>>, %arg7: memref<16x128xf32, #tpu.memory_space<vmem>>, %arg8: memref<16x128xf32, #tpu.memory_space<vmem>>) attributes {dimension_semantics = [#tpu.dimension_semantics<parallel>, #tpu.dimension_semantics<arbitrary>], iteration_bounds = array<i64: 1, 1>, scalar_prefetch = 0 : i64, scratch_operands = 1 : i64, tpu.core_type = #tpu.core_type<tc>, window_params = [{transform_indices = @transform_0, window_bounds = array<i64: 16, 32>}, {transform_indices = @transform_1, window_bounds = array<i64: 32, 128>}, {transform_indices = @transform_2, window_bounds = array<i64: 1, 128>}, {transform_indices = @transform_3, window_bounds = array<i64: 128, 128>}, {pipeline_mode = #tpu.pipeline_mode<synchronous>, transform_indices = @transform_4, window_bounds = array<i64: 1, 128>}, {transform_indices = @transform_5, window_bounds = array<i64: 16, 128>}]} {
    %c0_i32 = arith.constant 0 : i32
    %0 = arith.cmpi eq, %arg1, %c0_i32 : i32
    %1 = arith.extui %0 : i1 to i32
    %c0_i32_0 = arith.constant 0 : i32
    %2 = arith.cmpi ne, %1, %c0_i32_0 : i32
    scf.if %2 {
      %cst_16 = arith.constant 0.000000e+00 : f32
      %19 = vector.broadcast %cst_16 : f32 to vector<16x128xf32>
      %c0_17 = arith.constant 0 : index
      %c0_18 = arith.constant 0 : index
      %20 = vector.load %arg8[%c0_17, %c0_18] : memref<16x128xf32, #tpu.memory_space<vmem>>, vector<16x128xf32>
      tpu.vector_store %arg8[%c0_17, %c0_18], %19 {strides = array<i32>} : memref<16x128xf32, #tpu.memory_space<vmem>>, vector<16x128xf32>,
    } else {
    }
    %c0 = arith.constant 0 : index
    %c0_1 = arith.constant 0 : index
    %3 = vector.load %arg2[%c0, %c0_1] : memref<16x32xf32, #tpu.memory_space<vmem>>, vector<16x32xf32>
    %c0_2 = arith.constant 0 : index
    %c0_3 = arith.constant 0 : index
    %4 = vector.load %arg3[%c0_2, %c0_3] : memref<32x128xf32, #tpu.memory_space<vmem>>, vector<32x128xf32>
    %cst = arith.constant dense<0.000000e+00> : vector<16x128xf32>
    %5 = tpu.matmul %3, %4, %cst {dimension_numbers = #tpu.dot_dimension_numbers<[1], [0], [0], [1], [0, 0, 1, 1], [], []>} : vector<16x32xf32>, vector<32x128xf32>, vector<16x128xf32> -> vector<16x128xf32>
    %c0_4 = arith.constant 0 : index
    %c0_5 = arith.constant 0 : index
    %6 = vector.load %arg4[%c0_4, %c0_5] : memref<1x128xf32, #tpu.memory_space<vmem>>, vector<1x128xf32>
    %7 = vector.broadcast %6 : vector<1x128xf32> to vector<16x128xf32>
    %8 = arith.addf %5, %7 : vector<16x128xf32>
    %cst_6 = arith.constant 0.000000e+00 : f32
    %9 = vector.broadcast %cst_6 : f32 to vector<16x128xf32>
    %10 = arith.maximumf %8, %9 : vector<16x128xf32>
    %c0_7 = arith.constant 0 : index
    %c0_8 = arith.constant 0 : index
    %11 = vector.load %arg8[%c0_7, %c0_8] : memref<16x128xf32, #tpu.memory_space<vmem>>, vector<16x128xf32>
    %c0_9 = arith.constant 0 : index
    %c0_10 = arith.constant 0 : index
    %12 = vector.load %arg5[%c0_9, %c0_10] : memref<128x128xf32, #tpu.memory_space<vmem>>, vector<128x128xf32>
    %cst_11 = arith.constant dense<0.000000e+00> : vector<16x128xf32>
    %13 = tpu.matmul %10, %12, %cst_11 {dimension_numbers = #tpu.dot_dimension_numbers<[1], [0], [0], [1], [0, 0, 1, 1], [], []>} : vector<16x128xf32>, vector<128x128xf32>, vector<16x128xf32> -> vector<16x128xf32>
    %14 = arith.addf %11, %13 : vector<16x128xf32>
    %c0_12 = arith.constant 0 : index
    %c0_13 = arith.constant 0 : index
    %15 = vector.load %arg8[%c0_12, %c0_13] : memref<16x128xf32, #tpu.memory_space<vmem>>, vector<16x128xf32>
    tpu.vector_store %arg8[%c0_12, %c0_13], %14 {strides = array<i32>} : memref<16x128xf32, #tpu.memory_space<vmem>>, vector<16x128xf32>,
    %c0_i32_14 = arith.constant 0 : i32
    %16 = arith.cmpi eq, %arg1, %c0_i32_14 : i32
    %17 = arith.extui %16 : i1 to i32
    %c0_i32_15 = arith.constant 0 : i32
    %18 = arith.cmpi ne, %17, %c0_i32_15 : i32
    scf.if %18 {
      %c0_16 = arith.constant 0 : index
      %c0_17 = arith.constant 0 : index
      %19 = vector.load %arg8[%c0_16, %c0_17] : memref<16x128xf32, #tpu.memory_space<vmem>>, vector<16x128xf32>
      %c0_18 = arith.constant 0 : index
      %c0_19 = arith.constant 0 : index
      %20 = vector.load %arg6[%c0_18, %c0_19] : memref<1x128xf32, #tpu.memory_space<vmem>>, vector<1x128xf32>
      %21 = vector.broadcast %20 : vector<1x128xf32> to vector<16x128xf32>
      %22 = arith.addf %19, %21 : vector<16x128xf32>
      %c0_20 = arith.constant 0 : index
      %c0_21 = arith.constant 0 : index
      %23 = vector.load %arg7[%c0_20, %c0_21] : memref<16x128xf32, #tpu.memory_space<vmem>>, vector<16x128xf32>
      tpu.vector_store %arg7[%c0_20, %c0_21], %22 {strides = array<i32>} : memref<16x128xf32, #tpu.memory_space<vmem>>, vector<16x128xf32>,
    } else {
    }
    return
  }
  func.func @transform_0(%arg0: i32, %arg1: i32) -> (i32, i32) {
    %c0_i32 = arith.constant 0 : i32
    %c0_i32_0 = arith.constant 0 : i32
    return %arg0, %c0_i32 : i32, i32
  }
  func.func @transform_1(%arg0: i32, %arg1: i32) -> (i32, i32) {
    %c0_i32 = arith.constant 0 : i32
    %c0_i32_0 = arith.constant 0 : i32
    return %c0_i32, %arg1 : i32, i32
  }
  func.func @transform_2(%arg0: i32, %arg1: i32) -> (i32, i32) {
    %c0_i32 = arith.constant 0 : i32
    %c0_i32_0 = arith.constant 0 : i32
    return %c0_i32, %arg1 : i32, i32
  }
  func.func @transform_3(%arg0: i32, %arg1: i32) -> (i32, i32) {
    %c0_i32 = arith.constant 0 : i32
    %c0_i32_0 = arith.constant 0 : i32
    return %arg1, %c0_i32 : i32, i32
  }
  func.func @transform_4(%arg0: i32, %arg1: i32) -> (i32, i32) {
    %c0_i32 = arith.constant 0 : i32
    %c0_i32_0 = arith.constant 0 : i32
    %c0_i32_1 = arith.constant 0 : i32
    return %c0_i32, %c0_i32_0 : i32, i32
  }
  func.func @transform_5(%arg0: i32, %arg1: i32) -> (i32, i32) {
    %c0_i32 = arith.constant 0 : i32
    %c0_i32_0 = arith.constant 0 : i32
    return %arg0, %c0_i32 : i32, i32
  }
}

</mosaic_0001>

<llo_original>
// kernel: tpu_custom_call.1
$region0: #{tpu_custom_call.1}
  #allocation0 [shape = 'u32[]', space=smem, size = 0x4, offset = 0x4, fixed_abs, tag = 'smem constant byte address 0x4 - core index']
  #allocation1 [shape = 'u32[144,128]{1,0:T(1,128)}', space=vmem, size = 0x12000, scoped, tag = 'internal scratch']
  #allocation2 [shape = 'f32[16,128]{1,0:T(8,128)}', space=vmem, size = 0x2000, scoped, tag = 'scratch operand']
  %s0 = inlined_call_operand.hbm [shape: f32[16,32], index: 0, kind: input, shape index: {}]
  %s1 = inlined_call_operand.hbm [shape: f32[32,128], index: 1, kind: input, shape index: {}]
  %s2 = inlined_call_operand.vmem [shape: f32[1,128], index: 2, kind: input, shape index: {}]
  %s3 = inlined_call_operand.hbm [shape: f32[128,128], index: 3, kind: input, shape index: {}]
  %s4 = inlined_call_operand.vmem [shape: f32[1,128], index: 4, kind: input, shape index: {}]
  %s5 = inlined_call_operand.hbm [shape: f32[16,128], index: 5, kind: output, shape index: {}]
  %s6 = sld [smem:[#allocation0]]
  $region50: #{tpu_custom_call.1} parent=0
    _
  %s8 = ssub.s32 1, %s6
  %s9 = scalar_select 0, %s8, %s6
  $region1: #{tpu_custom_call.1} parent=0
    #allocation3 [shape = 'u8[8192]{0}', space=vmem, size = 0x2000, scoped, tag = 'input window, operand 0, single buffered']
    #allocation4 [shape = 's32[1]{0}', space=sflag, size = 0x4, scoped, tag = 'scoped memory for tpu_custom_call.1']
    #allocation5 [shape = 's32[1]{0}', space=sflag, size = 0x4, scoped, tag = 'scoped memory for tpu_custom_call.1']
    #allocation6 [shape = 'u8[16384]{0}', space=vmem, size = 0x4000, scoped, tag = 'input window, operand 1, single buffered']
    #allocation7 [shape = 's32[1]{0}', space=sflag, size = 0x4, scoped, tag = 'scoped memory for tpu_custom_call.1']
    #allocation8 [shape = 'u8[65536]{0}', space=vmem, size = 0x10000, scoped, tag = 'input window, operand 3, single buffered']
    #allocation9 [shape = 'u8[8192]{0}', space=vmem, size = 0x2000, scoped, tag = 'output window, operand 0, single buffered']
    %10 = vsyncpa [#allocation4], 0
    %11 = vsyncpa [#allocation7], 0
    %12 = vsyncpa [#allocation5], 0
    // Predicated region
    $region2: #{tpu_custom_call.1} parent=1 // pred_check
      _
    $region3: #{tpu_custom_call.1} parent=1 // pred_check_branch
      %14 = sbr.rel (0) target = $region5
    $region4: #{tpu_custom_call.1} parent=1 // pred_region
      %s16 = ssub.s32 256, 256
      %17 = vsyncadd [#allocation4], %s16
      %s18 = sshll.u32 [#allocation3], 4
      %s19 = int_to_ptr.vmem [resolvable:$true] %s18
      %24 = dma.hbm_to_vmem [thread:$0]  %s0, 256, %s19, [#allocation4], 128, 128, 8
    $region5: #{tpu_custom_call.1} parent=1 // pred_fallthru
      _
    // Predicated region
    $region6: #{tpu_custom_call.1} parent=1 // pred_check
      _
    $region7: #{tpu_custom_call.1} parent=1 // pred_check_branch
      %26 = sbr.rel (0) target = $region9
    $region8: #{tpu_custom_call.1} parent=1 // pred_region
      %s28 = ssub.s32 512, 512
      %29 = vsyncadd [#allocation7], %s28
      %s30 = sshll.u32 [#allocation6], 4
      %s31 = int_to_ptr.vmem [resolvable:$true] %s30
      %36 = dma.hbm_to_vmem [thread:$0]  %s1, 512, %s31, [#allocation7], 128, 128, 8
    $region9: #{tpu_custom_call.1} parent=1 // pred_fallthru
      _
    // Predicated region
    $region10: #{tpu_custom_call.1} parent=1 // pred_check
      _
    $region11: #{tpu_custom_call.1} parent=1 // pred_check_branch
      %38 = sbr.rel (0) target = $region13
    $region12: #{tpu_custom_call.1} parent=1 // pred_region
      _
    $region13: #{tpu_custom_call.1} parent=1 // pred_fallthru
      _
    // Predicated region
    $region14: #{tpu_custom_call.1} parent=1 // pred_check
      _
    $region15: #{tpu_custom_call.1} parent=1 // pred_check_branch
      %40 = sbr.rel (0) target = $region17
    $region16: #{tpu_custom_call.1} parent=1 // pred_region
      %s42 = ssub.s32 2048, 2048
      %43 = vsyncadd [#allocation7], %s42
      %s44 = sshll.u32 [#allocation8], 4
      %s45 = int_to_ptr.vmem [resolvable:$true] %s44
      %50 = dma.hbm_to_vmem [thread:$0]  %s3, 2048, %s45, [#allocation7], 128, 128, 8
    $region17: #{tpu_custom_call.1} parent=1 // pred_fallthru
      _
    // Predicated region
    $region18: #{tpu_custom_call.1} parent=1 // pred_check
      _
    $region19: #{tpu_custom_call.1} parent=1 // pred_check_branch
      %52 = sbr.rel (0) target = $region21
    $region20: #{tpu_custom_call.1} parent=1 // pred_region
      _
    $region21: #{tpu_custom_call.1} parent=1 // pred_fallthru
      _
    // Predicated region
    $region22: #{tpu_custom_call.1} parent=1 // pred_check
      _
    $region23: #{tpu_custom_call.1} parent=1 // pred_check_branch
      %54 = sbr.rel (0) target = $region25
    $region24: #{tpu_custom_call.1} parent=1 // pred_region
      %55 = dma.done [#allocation4], 256
    $region25: #{tpu_custom_call.1} parent=1 // pred_fallthru
      _
    // Predicated region
    $region26: #{tpu_custom_call.1} parent=1 // pred_check
      _
    $region27: #{tpu_custom_call.1} parent=1 // pred_check_branch
      %57 = sbr.rel (0) target = $region29
    $region28: #{tpu_custom_call.1} parent=1 // pred_region
      %58 = dma.done [#allocation7], 512
    $region29: #{tpu_custom_call.1} parent=1 // pred_fallthru
      _
    // Predicated region
    $region30: #{tpu_custom_call.1} parent=1 // pred_check
      _
    $region31: #{tpu_custom_call.1} parent=1 // pred_check_branch
      %60 = sbr.rel (0) target = $region33
    $region32: #{tpu_custom_call.1} parent=1 // pred_region
      %61 = dma.done [#allocation7], 2048
    $region33: #{tpu_custom_call.1} parent=1 // pred_fallthru
      _
    %p62 = scmp.eq.s32.totalorder 0, 0
    // Predicated region
    $region34: #{tpu_custom_call.1} parent=1 // pred_check
      %p63 = pneg %p62
    $region35: #{tpu_custom_call.1} parent=1 // pred_check_branch
      %65 = sbr.rel (%p63) target = $region37
    $region36: #{tpu_custom_call.1} parent=1 // pred_region
      %66 = vst [vmem:[#allocation2] sm:$0xff] 0.0
      %67 = vst [vmem:[#allocation2 + $0x8] sm:$0xff] 0.0
    $region37: #{tpu_custom_call.1} parent=1 // pred_fallthru
      _
    %v68 = vld [vmem:[#allocation3] sm:$0xff]
    %v69 = vld [vmem:[#allocation3 + $0x8] sm:$0xff]
    %v70 = vld [vmem:[#allocation6] sm:$0xff]
    %v71 = vld [vmem:[#allocation6 + $0x8] sm:$0xff]
    %v72 = vld [vmem:[#allocation6 + $0x10] sm:$0xff]
    %v73 = vld [vmem:[#allocation6 + $0x18] sm:$0xff]
    %v74 = vld [vmem:[%s2] sm:$0x1]
    %v76 = vlaneseq
    %v77 = vshrl.u32 %v76, 7
    %v78 = vsub.s32 0, %v77
    %v79 = vrot.slane %v74, %v78
    %vm81 = vcmask 261120
    %v83 = vsel %vm81, %v68, 0
    %v86 = vsel %vm81, %v69, 0
    %88 = vmatprep.subr.mxu0 0.0
    %89 = vmatpush1.msra.mxu0 0.0
    %90 = vmatprep.subr.mxu0 0.0
    %91 = vmatpush1.msra.mxu0 0.0
    %92 = vmatprep.subr.mxu0 0.0
    %93 = vmatpush1.msra.mxu0 0.0
    %94 = vmatprep.subr.mxu0 0.0
    %95 = vmatpush1.msra.mxu0 0.0
    %96 = vmatprep.subr.mxu0 0.0
    %97 = vmatpush1.msra.mxu0 0.0
    %98 = vmatprep.subr.mxu0 0.0
    %99 = vmatpush1.msra.mxu0 0.0
    %100 = vmatprep.subr.mxu0 0.0
    %101 = vmatpush1.msra.mxu0 0.0
    %102 = vmatprep.subr.mxu0 0.0
    %103 = vmatpush1.msra.mxu0 0.0
    %104 = vmatprep.subr.mxu0 0.0
    %105 = vmatpush1.msra.mxu0 0.0
    %106 = vmatprep.subr.mxu0 0.0
    %107 = vmatpush1.msra.mxu0 0.0
    %108 = vmatprep.subr.mxu0 0.0
    %109 = vmatpush1.msra.mxu0 0.0
    %110 = vmatprep.subr.mxu0 0.0
    %111 = vmatpush1.msra.mxu0 0.0
    %112 = vmatprep.subr.mxu0 0.0
    %113 = vmatpush1.msra.mxu0 %v73
    %114 = vmatprep.subr.mxu0 0.0
    %115 = vmatpush1.msra.mxu0 %v72
    %116 = vmatprep.subr.mxu0 0.0
    %117 = vmatpush1.msra.mxu0 %v71
    %118 = vmatprep.subr.mxu0 0.0
    %119 = vmatpush1.msra.mxu0 %v70
    %120 = vmatprep.subr.mxu0 0.0
    %121 = vmatpush2.msra.mxu0 0.0
    %122 = vmatprep.subr.mxu0 0.0
    %123 = vmatpush2.msra.mxu0 0.0
    %124 = vmatprep.subr.mxu0 0.0
    %125 = vmatpush2.msra.mxu0 0.0
    %126 = vmatprep.subr.mxu0 0.0
    %127 = vmatpush2.msra.mxu0 0.0
    %128 = vmatprep.subr.mxu0 0.0
    %129 = vmatpush2.msra.mxu0 0.0
    %130 = vmatprep.subr.mxu0 0.0
    %131 = vmatpush2.msra.mxu0 0.0
    %132 = vmatprep.subr.mxu0 0.0
    %133 = vmatpush2.msra.mxu0 0.0
    %134 = vmatprep.subr.mxu0 0.0
    %135 = vmatpush2.msra.mxu0 0.0
    %136 = vmatprep.subr.mxu0 0.0
    %137 = vmatpush2.msra.mxu0 0.0
    %138 = vmatprep.subr.mxu0 0.0
    %139 = vmatpush2.msra.mxu0 0.0
    %140 = vmatprep.subr.mxu0 0.0
    %141 = vmatpush2.msra.mxu0 0.0
    %142 = vmatprep.subr.mxu0 0.0
    %143 = vmatpush2.msra.mxu0 0.0
    %144 = vmatprep.subr.mxu0 0.0
    %145 = vmatpush2.msra.mxu0 0.0
    %146 = vmatprep.subr.mxu0 0.0
    %147 = vmatpush2.msra.mxu0 0.0
    %148 = vmatprep.subr.mxu0 0.0
    %149 = vmatpush2.msra.mxu0 0.0
    %150 = vmatprep.subr.mxu0 0.0
    %151 = vmatpush2.msra.mxu0 0.0
    %152 = vmatprep.mubr.f32.mxu0 0.0
    %153 = vmatmul.mubr.f32.gmra.mxu0 %v83
    %v154 = vpop.f32.mrf.mxu0
    %v155 = vadd.f32 %v79, %v154
    %v156 = vpop.f32.mrf.mxu0
    %157 = vmatprep.mubr.f32.mxu0 0.0
    %158 = vmatmul.mubr.f32.gmra.mxu0 %v86
    %v159 = vpop.f32.mrf.mxu0
    %v160 = vadd.f32 %v79, %v159
    %v161 = vpop.f32.mrf.mxu0
    %162 = vdwg.mxu0
    %v163 = vmax.f32 %v155, 0.0
    %v164 = vmax.f32 %v160, 0.0
    %v165 = vld [vmem:[#allocation2] sm:$0xff]
    %v166 = vld [vmem:[#allocation2 + $0x8] sm:$0xff]
    %v167 = vld [vmem:[#allocation8] sm:$0xff]
    %v168 = vld [vmem:[#allocation8 + $0x8] sm:$0xff]
    %v169 = vld [vmem:[#allocation8 + $0x10] sm:$0xff]
    %v170 = vld [vmem:[#allocation8 + $0x18] sm:$0xff]
    %v171 = vld [vmem:[#allocation8 + $0x20] sm:$0xff]
    %v172 = vld [vmem:[#allocation8 + $0x28] sm:$0xff]
    %v173 = vld [vmem:[#allocation8 + $0x30] sm:$0xff]
    %v174 = vld [vmem:[#allocation8 + $0x38] sm:$0xff]
    %v175 = vld [vmem:[#allocation8 + $0x40] sm:$0xff]
    %v176 = vld [vmem:[#allocation8 + $0x48] sm:$0xff]
    %v177 = vld [vmem:[#allocation8 + $0x50] sm:$0xff]
    %v178 = vld [vmem:[#allocation8 + $0x58] sm:$0xff]
    %v179 = vld [vmem:[#allocation8 + $0x60] sm:$0xff]
    %v180 = vld [vmem:[#allocation8 + $0x68] sm:$0xff]
    %v181 = vld [vmem:[#allocation8 + $0x70] sm:$0xff]
    %v182 = vld [vmem:[#allocation8 + $0x78] sm:$0xff]
    %183 = vmatprep.subr.mxu0 0.0
    %184 = vmatpush1.msra.mxu0 %v182
    %185 = vmatprep.subr.mxu0 0.0
    %186 = vmatpush1.msra.mxu0 %v181
    %187 = vmatprep.subr.mxu0 0.0
    %188 = vmatpush1.msra.mxu0 %v180
    %189 = vmatprep.subr.mxu0 0.0
    %190 = vmatpush1.msra.mxu0 %v179
    %191 = vmatprep.subr.mxu0 0.0
    %192 = vmatpush1.msra.mxu0 %v178
    %193 = vmatprep.subr.mxu0 0.0
    %194 = vmatpush1.msra.mxu0 %v177
    %195 = vmatprep.subr.mxu0 0.0
    %196 = vmatpush1.msra.mxu0 %v176
    %197 = vmatprep.subr.mxu0 0.0
    %198 = vmatpush1.msra.mxu0 %v175
    %199 = vmatprep.subr.mxu0 0.0
    %200 = vmatpush1.msra.mxu0 %v174
    %201 = vmatprep.subr.mxu0 0.0
    %202 = vmatpush1.msra.mxu0 %v173
    %203 = vmatprep.subr.mxu0 0.0
    %204 = vmatpush1.msra.mxu0 %v172
    %205 = vmatprep.subr.mxu0 0.0
    %206 = vmatpush1.msra.mxu0 %v171
    %207 = vmatprep.subr.mxu0 0.0
    %208 = vmatpush1.msra.mxu0 %v170
    %209 = vmatprep.subr.mxu0 0.0
    %210 = vmatpush1.msra.mxu0 %v169
    %211 = vmatprep.subr.mxu0 0.0
    %212 = vmatpush1.msra.mxu0 %v168
    %213 = vmatprep.subr.mxu0 0.0
    %214 = vmatpush1.msra.mxu0 %v167
    %215 = vmatprep.subr.mxu0 0.0
    %216 = vmatpush2.msra.mxu0 0.0
    %217 = vmatprep.subr.mxu0 0.0
    %218 = vmatpush2.msra.mxu0 0.0
    %219 = vmatprep.subr.mxu0 0.0
    %220 = vmatpush2.msra.mxu0 0.0
    %221 = vmatprep.subr.mxu0 0.0
    %222 = vmatpush2.msra.mxu0 0.0
    %223 = vmatprep.subr.mxu0 0.0
    %224 = vmatpush2.msra.mxu0 0.0
    %225 = vmatprep.subr.mxu0 0.0
    %226 = vmatpush2.msra.mxu0 0.0
    %227 = vmatprep.subr.mxu0 0.0
    %228 = vmatpush2.msra.mxu0 0.0
    %229 = vmatprep.subr.mxu0 0.0
    %230 = vmatpush2.msra.mxu0 0.0
    %231 = vmatprep.subr.mxu0 0.0
    %232 = vmatpush2.msra.mxu0 0.0
    %233 = vmatprep.subr.mxu0 0.0
    %234 = vmatpush2.msra.mxu0 0.0
    %235 = vmatprep.subr.mxu0 0.0
    %236 = vmatpush2.msra.mxu0 0.0
    %237 = vmatprep.subr.mxu0 0.0
    %238 = vmatpush2.msra.mxu0 0.0
    %239 = vmatprep.subr.mxu0 0.0
    %240 = vmatpush2.msra.mxu0 0.0
    %241 = vmatprep.subr.mxu0 0.0
    %242 = vmatpush2.msra.mxu0 0.0
    %243 = vmatprep.subr.mxu0 0.0
    %244 = vmatpush2.msra.mxu0 0.0
    %245 = vmatprep.subr.mxu0 0.0
    %246 = vmatpush2.msra.mxu0 0.0
    %247 = vmatprep.mubr.f32.mxu0 0.0
    %248 = vmatmul.mubr.f32.gmra.mxu0 %v163
    %v249 = vpop.f32.mrf.mxu0
    %v250 = vadd.f32 0.0, %v249
    %v251 = vpop.f32.mrf.mxu0
    %252 = vmatprep.mubr.f32.mxu0 0.0
    %253 = vmatmul.mubr.f32.gmra.mxu0 %v164
    %v254 = vpop.f32.mrf.mxu0
    %v255 = vadd.f32 0.0, %v254
    %v256 = vpop.f32.mrf.mxu0
    %257 = vdwg.mxu0
    %v258 = vadd.f32 %v165, %v250
    %v259 = vadd.f32 %v166, %v255
    %260 = vst [vmem:[#allocation2] sm:$0xff] %v258
    %261 = vst [vmem:[#allocation2 + $0x8] sm:$0xff] %v259
    // Predicated region
    $region38: #{tpu_custom_call.1} parent=1 // pred_check
      %p262 = pneg %p62
    $region39: #{tpu_custom_call.1} parent=1 // pred_check_branch
      %264 = sbr.rel (%p262) target = $region41
    $region40: #{tpu_custom_call.1} parent=1 // pred_region
      %v265 = vld [vmem:[#allocation2] sm:$0xff]
      %v266 = vld [vmem:[#allocation2 + $0x8] sm:$0xff]
      %v267 = vld [vmem:[%s4] sm:$0x1]
      %v269 = vlaneseq
      %v270 = vshrl.u32 %v269, 7
      %v271 = vsub.s32 0, %v270
      %v272 = vrot.slane %v267, %v271
      %v274 = vadd.f32 %v265, %v272
      %v275 = vadd.f32 %v266, %v272
      %276 = vst [vmem:[#allocation9] sm:$0xff] %v274
      %277 = vst [vmem:[#allocation9 + $0x8] sm:$0xff] %v275
    $region41: #{tpu_custom_call.1} parent=1 // pred_fallthru
      _
    // Predicated region
    $region42: #{tpu_custom_call.1} parent=1 // pred_check
      _
    $region43: #{tpu_custom_call.1} parent=1 // pred_check_branch
      %279 = sbr.rel (0) target = $region45
    $region44: #{tpu_custom_call.1} parent=1 // pred_region
      %s281 = ssub.s32 256, 256
      %282 = vsyncadd [#allocation5], %s281
      %s283 = sshll.u32 [#allocation9], 4
      %s284 = int_to_ptr.vmem [resolvable:$true] %s283
      %289 = dma.vmem_to_hbm [thread:$0]  %s284, 256, %s5, [#allocation5], 128, 128, 8
    $region45: #{tpu_custom_call.1} parent=1 // pred_fallthru
      _
    // Predicated region
    $region46: #{tpu_custom_call.1} parent=1 // pred_check
      _
    $region47: #{tpu_custom_call.1} parent=1 // pred_check_branch
      %291 = sbr.rel (0) target = $region49
    $region48: #{tpu_custom_call.1} parent=1 // pred_region
      %292 = dma.done [#allocation5], 256
    $region49: #{tpu_custom_call.1} parent=1 // pred_fallthru
      _
    %293 = vsyncpa [#allocation4], 1
    %294 = vsyncpa [#allocation7], 1
    %295 = vsyncpa [#allocation5], 1

</llo_original>
